<compile_context>
chip_gen: v5e
topology: v5e:2x2
jax: 0.10.0
libtpu: 0.0.40
codegen_flags: <defaults>
</compile_context>

<pallas_src>
import jax
import jax.numpy as jnp
from jax.experimental import pallas as pl
from jax.experimental.pallas import tpu as pltpu

N_POINTS = 64
HIDDEN = 32
FEATURE_POINT_RADIUS = 0.02          # matches Model(feature_point_radius=0.02)
_R2 = FEATURE_POINT_RADIUS ** 2
_OUT_ROWS = 12                       # 3 (pos) + 9 (ori)


def _manip_kernel(xyz_ref, rgb_ref, s1_ref, s2_ref, out_ref):
    """One invocation for the whole batch.

    xyz_ref, rgb_ref : (B, 3, N) f32   channels-first, points on lanes
    s1_ref           : (2H, 4)  f32    cols 0:3 = fused layer-1 W^T, col 3 = bias
    s2_ref           : (10, 2H+1) f32  cols 0:2H = block-diag layer-2 W^T, last col = bias
    out_ref          : (12, B) f32     rows 0:3 = pos, rows 3:12 = normalized ori
    """
    B = xyz_ref.shape[0]
    K2 = s2_ref.shape[1] - 1                 # 2 * HIDDEN

    w1t = s1_ref[:, 0:3]                     # (2H, 3)
    b1c = s1_ref[:, 3:4]                     # (2H, 1)
    w2t = s2_ref[:, 0:K2]                    # (10, 2H)
    b2c = s2_ref[:, K2:K2 + 1]               # (10, 1)

    cols = []
    for b in range(B):                       # B is tiny -> static unroll
        xyz = xyz_ref[b]                     # (3, N)
        rgb = rgb_ref[b]                     # (3, N)  -- 'feature' = rgb

        # ---- fused layer 1 (pos + ori nets): K=3 -> 3 VPU FMAs ------------
        acc = w1t[:, 0:1] * rgb[0:1, :]
        acc = acc + w1t[:, 1:2] * rgb[1:2, :]
        acc = acc + w1t[:, 2:3] * rgb[2:3, :]
        h = jnp.maximum(acc + b1c, 0.0)      # (2H, N)

        # ---- fused layer 2: one block-diagonal MXU dot ---------------------
        z = jnp.dot(w2t, h, preferred_element_type=jnp.float32) + b2c  # (10, N)
        score = z[0:1, :]                    # (1, N)  pos-net heat
        ofeat = z[1:10, :]                   # (9, N)  ori-net features

        # ---- softmax over points (lane reductions) -------------------------
        m = jnp.max(score, axis=1, keepdims=True)             # (1, 1)
        e = jnp.exp(score - m)                                 # (1, N)
        w = e / jnp.sum(e, axis=1, keepdims=True)              # (1, N) exact

        # output_pos = sum_n w_n * xyz_n
        pos = jnp.sum(xyz * w, axis=1, keepdims=True)          # (3, 1)

        # ---- radius selection around the predicted position ---------------
        diff = xyz - pos                                       # (3, N)
        d2 = jnp.sum(diff * diff, axis=0, keepdims=True)       # (1, N)
        mask = (d2 < _R2).astype(jnp.float32)                  # (1, N)
        cnt = jnp.sum(mask, axis=1, keepdims=True)             # (1, 1)

        sel_sum = jnp.sum(ofeat * mask, axis=1, keepdims=True)  # (9, 1)
        fallback = jnp.sum(ofeat * w, axis=1, keepdims=True)    # (9, 1)
        sel_mean = sel_sum * pl.reciprocal(jnp.maximum(cnt, 1.0), approx=True)
        ori = jnp.where(cnt > 0.0, sel_mean, fallback)          # (9, 1)

        # ---- normalize each consecutive 3-vector block ---------------------
        o2 = ori * ori
        n0 = jnp.sqrt(jnp.sum(o2[0:3, :], axis=0, keepdims=True)) + 1e-8
        n1 = jnp.sqrt(jnp.sum(o2[3:6, :], axis=0, keepdims=True)) + 1e-8
        n2 = jnp.sqrt(jnp.sum(o2[6:9, :], axis=0, keepdims=True)) + 1e-8
        ori_n = jnp.concatenate(
            [ori[0:3, :] * pl.reciprocal(n0, approx=True),
             ori[3:6, :] * pl.reciprocal(n1, approx=True),
             ori[6:9, :] * pl.reciprocal(n2, approx=True)], axis=0)  # (9, 1)

        cols.append(jnp.concatenate([pos, ori_n], axis=0))      # (12, 1)

    out_ref[...] = jnp.concatenate(cols, axis=1)                # (12, B)


def pack_params(params):
    """Pack the 8 weight/bias tensors into 2 slabs (done once, outside jit)."""
    pw1, pb1, pw2, pb2, ow1, ob1, ow2, ob2 = params
    H = pw1.shape[1]
    # fused layer 1: rows 0:H -> pos net, rows H:2H -> ori net
    w1t = jnp.concatenate([pw1, ow1], axis=1).T                 # (2H, 3)
    b1c = jnp.concatenate([pb1, ob1], axis=1).T                 # (2H, 1)
    slab1 = jnp.concatenate([w1t, b1c], axis=1)                 # (2H, 4)
    # fused layer 2 (block-diagonal): row 0 -> score, rows 1:10 -> ori feats
    w2t = jnp.zeros((10, 2 * H), jnp.float32)
    w2t = w2t.at[0:1, 0:H].set(pw2.T)                           # (1, H)
    w2t = w2t.at[1:10, H:2 * H].set(ow2.T)                      # (9, H)
    b2c = jnp.concatenate([pb2, ob2], axis=1).T                 # (10, 1)
    slab2 = jnp.concatenate([w2t, b2c], axis=1)                 # (10, 2H+1)
    return slab1.astype(jnp.float32), slab2.astype(jnp.float32)


@jax.jit
def manip_forward(xyz, rgb, slab1, slab2):
    """xyz, rgb: (B, N, 3) f32. Returns (output_pos (B, 3), output_ori (B, 9))."""
    B = xyz.shape[0]
    xyz_cf = jnp.transpose(xyz, (0, 2, 1))   # (B, 3, N): points -> lanes
    rgb_cf = jnp.transpose(rgb, (0, 2, 1))

    out = pl.pallas_call(
        _manip_kernel,
        out_shape=jax.ShapeDtypeStruct((_OUT_ROWS, B), jnp.float32),
        in_specs=[pl.BlockSpec(memory_space=pltpu.MemorySpace.VMEM)] * 4,
        out_specs=pl.BlockSpec(memory_space=pltpu.MemorySpace.VMEM),
    )(xyz_cf, rgb_cf, slab1, slab2)
    # NOTE: for large B on v7x, reintroduce a "parallel" batch-chunk grid axis
    # to use both TensorCores; at B=2 a single invocation is strictly cheaper.

    res = out.T                               # (B, 12)
    return res[:, 0:3], res[:, 3:12]


def _reference_jnp(xyz, rgb, params):
    """Pure-JAX reference of the same math for a sanity check."""
    pw1, pb1, pw2, pb2, ow1, ob1, ow2, ob2 = params
    B = xyz.shape[0]
    poss, oris = [], []
    for i in range(B):
        x, f = xyz[i], rgb[i]
        score = jnp.maximum(f @ pw1 + pb1, 0.0) @ pw2 + pb2
        w = jax.nn.softmax(score.reshape(-1))[:, None]
        pos = jnp.sum(x * w, axis=0)
        ofeat = jnp.maximum(f @ ow1 + ob1, 0.0) @ ow2 + ob2
        d = jnp.linalg.norm(x - pos[None, :], axis=1)
        mask = (d < FEATURE_POINT_RADIUS).astype(jnp.float32)[:, None]
        cnt = jnp.sum(mask)
        sel = jnp.sum(ofeat * mask, axis=0) / jnp.maximum(cnt, 1.0)
        fb = jnp.sum(ofeat * w, axis=0)
        ori = jnp.where(cnt > 0.0, sel, fb)
        blocks = [ori[3 * k:3 * (k + 1)] /
                  (jnp.linalg.norm(ori[3 * k:3 * (k + 1)]) + 1e-8) for k in range(3)]
        poss.append(pos)
        oris.append(jnp.concatenate(blocks))
    return jnp.stack(poss), jnp.stack(oris)


if __name__ == "__main__":
    key = jax.random.PRNGKey(0)
    k = jax.random.split(key, 10)

    B, N, H = 2, N_POINTS, HIDDEN
    xyz = jax.random.uniform(k[0], (B, N, 3), jnp.float32) * 0.5       # point coords
    rgb = jax.random.uniform(k[1], (B, N, 3), jnp.float32)             # colors / features

    # deterministic synthetic parameters for the two backbone stand-ins
    pw1 = jax.random.normal(k[2], (3, H), jnp.float32) * 0.3
    pb1 = jax.random.normal(k[3], (1, H), jnp.float32) * 0.05
    pw2 = jax.random.normal(k[4], (H, 1), jnp.float32) * 0.3
    pb2 = jax.random.normal(k[5], (1, 1), jnp.float32) * 0.05
    ow1 = jax.random.normal(k[6], (3, H), jnp.float32) * 0.3
    ob1 = jax.random.normal(k[7], (1, H), jnp.float32) * 0.05
    ow2 = jax.random.normal(k[8], (H, 9), jnp.float32) * 0.3
    ob2 = jax.random.normal(k[9], (1, 9), jnp.float32) * 0.05
    params = (pw1, pb1, pw2, pb2, ow1, ob1, ow2, ob2)

    slab1, slab2 = pack_params(params)

    out_pos, out_ori = manip_forward(xyz, rgb, slab1, slab2)
    out_pos = jax.block_until_ready(out_pos)
    out_ori = jax.block_until_ready(out_ori)

    ref_pos, ref_ori = _reference_jnp(xyz, rgb, params)
    assert out_pos.shape == (B, 3) and out_ori.shape == (B, 9)
    assert bool(jnp.all(jnp.isfinite(out_pos))) and bool(jnp.all(jnp.isfinite(out_ori)))
    assert jnp.allclose(out_pos, ref_pos, atol=2e-2, rtol=2e-2)
    assert jnp.allclose(out_ori, ref_ori, atol=2e-2, rtol=2e-2)

    print("KERNEL_OK")
</pallas_src>

<mosaic_0001>
module attributes {stable_mosaic.version = 11 : i64} {
  func.func @_manip_kernel(%arg0: memref<2x3x64xf32, #tpu.memory_space<vmem>>, %arg1: memref<2x3x64xf32, #tpu.memory_space<vmem>>, %arg2: memref<64x4xf32, #tpu.memory_space<vmem>>, %arg3: memref<10x65xf32, #tpu.memory_space<vmem>>, %arg4: memref<12x2xf32, #tpu.memory_space<vmem>>) attributes {dimension_semantics = [], scalar_prefetch = 0 : i64, scratch_operands = 0 : i64, tpu.core_type = #tpu.core_type<tc>} {
    %c0 = arith.constant 0 : index
    %c0_0 = arith.constant 0 : index
    %0 = vector.load %arg2[%c0, %c0_0] : memref<64x4xf32, #tpu.memory_space<vmem>>, vector<64x3xf32>
    %c0_1 = arith.constant 0 : index
    %c3 = arith.constant 3 : index
    %1 = vector.load %arg2[%c0_1, %c3] : memref<64x4xf32, #tpu.memory_space<vmem>>, vector<64x1xf32>
    %c0_2 = arith.constant 0 : index
    %c0_3 = arith.constant 0 : index
    %2 = vector.load %arg3[%c0_2, %c0_3] : memref<10x65xf32, #tpu.memory_space<vmem>>, vector<10x64xf32>
    %c0_4 = arith.constant 0 : index
    %c64 = arith.constant 64 : index
    %3 = vector.load %arg3[%c0_4, %c64] : memref<10x65xf32, #tpu.memory_space<vmem>>, vector<10x1xf32>
    %c0_5 = arith.constant 0 : index
    %c0_6 = arith.constant 0 : index
    %c0_7 = arith.constant 0 : index
    %4 = vector.load %arg0[%c0_5, %c0_6, %c0_7] : memref<2x3x64xf32, #tpu.memory_space<vmem>>, vector<1x3x64xf32>
    %5 = vector.shape_cast %4 : vector<1x3x64xf32> to vector<3x64xf32>
    %c0_8 = arith.constant 0 : index
    %c0_9 = arith.constant 0 : index
    %c0_10 = arith.constant 0 : index
    %6 = vector.load %arg1[%c0_8, %c0_9, %c0_10] : memref<2x3x64xf32, #tpu.memory_space<vmem>>, vector<1x3x64xf32>
    %7 = vector.shape_cast %6 : vector<1x3x64xf32> to vector<3x64xf32>
    %8 = vector.extract_strided_slice %0 {offsets = [0, 0], sizes = [64, 1], strides = [1, 1]} : vector<64x3xf32> to vector<64x1xf32>
    %9 = vector.extract_strided_slice %7 {offsets = [0, 0], sizes = [1, 64], strides = [1, 1]} : vector<3x64xf32> to vector<1x64xf32>
    %10 = vector.broadcast %8 : vector<64x1xf32> to vector<64x64xf32>
    %11 = vector.broadcast %9 : vector<1x64xf32> to vector<64x64xf32>
    %12 = arith.mulf %10, %11 : vector<64x64xf32>
    %13 = vector.extract_strided_slice %0 {offsets = [0, 1], sizes = [64, 1], strides = [1, 1]} : vector<64x3xf32> to vector<64x1xf32>
    %14 = vector.extract_strided_slice %7 {offsets = [1, 0], sizes = [1, 64], strides = [1, 1]} : vector<3x64xf32> to vector<1x64xf32>
    %15 = vector.broadcast %13 : vector<64x1xf32> to vector<64x64xf32>
    %16 = vector.broadcast %14 : vector<1x64xf32> to vector<64x64xf32>
    %17 = arith.mulf %15, %16 : vector<64x64xf32>
    %18 = arith.addf %12, %17 : vector<64x64xf32>
    %19 = vector.extract_strided_slice %0 {offsets = [0, 2], sizes = [64, 1], strides = [1, 1]} : vector<64x3xf32> to vector<64x1xf32>
    %20 = vector.extract_strided_slice %7 {offsets = [2, 0], sizes = [1, 64], strides = [1, 1]} : vector<3x64xf32> to vector<1x64xf32>
    %21 = vector.broadcast %19 : vector<64x1xf32> to vector<64x64xf32>
    %22 = vector.broadcast %20 : vector<1x64xf32> to vector<64x64xf32>
    %23 = arith.mulf %21, %22 : vector<64x64xf32>
    %24 = arith.addf %18, %23 : vector<64x64xf32>
    %25 = vector.broadcast %1 : vector<64x1xf32> to vector<64x64xf32>
    %26 = arith.addf %24, %25 : vector<64x64xf32>
    %cst = arith.constant 0.000000e+00 : f32
    %27 = vector.broadcast %cst : f32 to vector<64x64xf32>
    %28 = arith.maximumf %26, %27 : vector<64x64xf32>
    %cst_11 = arith.constant dense<0.000000e+00> : vector<10x64xf32>
    %29 = tpu.matmul %2, %28, %cst_11 {dimension_numbers = #tpu.dot_dimension_numbers<[1], [0], [0], [1], [0, 0, 1, 1], [], []>} : vector<10x64xf32>, vector<64x64xf32>, vector<10x64xf32> -> vector<10x64xf32>
    %30 = vector.broadcast %3 : vector<10x1xf32> to vector<10x64xf32>
    %31 = arith.addf %29, %30 : vector<10x64xf32>
    %32 = vector.extract_strided_slice %31 {offsets = [0, 0], sizes = [1, 64], strides = [1, 1]} : vector<10x64xf32> to vector<1x64xf32>
    %33 = vector.extract_strided_slice %31 {offsets = [1, 0], sizes = [9, 64], strides = [1, 1]} : vector<10x64xf32> to vector<9x64xf32>
    %cst_12 = arith.constant dense<0xFF800000> : vector<1xf32>
    %34 = vector.multi_reduction <maximumf>, %32, %cst_12 [1] : vector<1x64xf32> to vector<1xf32>
    %35 = vector.shape_cast %34 : vector<1xf32> to vector<1x1xf32>
    %36 = vector.broadcast %35 : vector<1x1xf32> to vector<1x64xf32>
    %37 = arith.subf %32, %36 : vector<1x64xf32>
    %38 = math.exp %37 : vector<1x64xf32>
    %cst_13 = arith.constant dense<0.000000e+00> : vector<1xf32>
    %39 = vector.multi_reduction <add>, %38, %cst_13 [1] : vector<1x64xf32> to vector<1xf32>
    %40 = vector.shape_cast %39 : vector<1xf32> to vector<1x1xf32>
    %41 = vector.broadcast %40 : vector<1x1xf32> to vector<1x64xf32>
    %42 = arith.divf %38, %41 : vector<1x64xf32>
    %43 = vector.broadcast %42 : vector<1x64xf32> to vector<3x64xf32>
    %44 = arith.mulf %5, %43 : vector<3x64xf32>
    %cst_14 = arith.constant dense<0.000000e+00> : vector<3xf32>
    %45 = vector.multi_reduction <add>, %44, %cst_14 [1] : vector<3x64xf32> to vector<3xf32>
    %46 = vector.shape_cast %45 : vector<3xf32> to vector<3x1xf32>
    %47 = vector.broadcast %46 : vector<3x1xf32> to vector<3x64xf32>
    %48 = arith.subf %5, %47 : vector<3x64xf32>
    %49 = arith.mulf %48, %48 : vector<3x64xf32>
    %cst_15 = arith.constant dense<0.000000e+00> : vector<64xf32>
    %50 = vector.multi_reduction <add>, %49, %cst_15 [0] : vector<3x64xf32> to vector<64xf32>
    %51 = vector.shape_cast %50 : vector<64xf32> to vector<1x64xf32>
    %cst_16 = arith.constant 4.000000e-04 : f32
    %52 = vector.broadcast %cst_16 : f32 to vector<1x64xf32>
    %53 = arith.cmpf olt, %51, %52 : vector<1x64xf32>
    %54 = arith.extui %53 : vector<1x64xi1> to vector<1x64xi32>
    %55 = arith.sitofp %54 : vector<1x64xi32> to vector<1x64xf32>
    %cst_17 = arith.constant dense<0.000000e+00> : vector<1xf32>
    %56 = vector.multi_reduction <add>, %55, %cst_17 [1] : vector<1x64xf32> to vector<1xf32>
    %57 = vector.shape_cast %56 : vector<1xf32> to vector<1x1xf32>
    %58 = vector.broadcast %55 : vector<1x64xf32> to vector<9x64xf32>
    %59 = arith.mulf %33, %58 : vector<9x64xf32>
    %cst_18 = arith.constant dense<0.000000e+00> : vector<9xf32>
    %60 = vector.multi_reduction <add>, %59, %cst_18 [1] : vector<9x64xf32> to vector<9xf32>
    %61 = vector.shape_cast %60 : vector<9xf32> to vector<9x1xf32>
    %62 = vector.broadcast %42 : vector<1x64xf32> to vector<9x64xf32>
    %63 = arith.mulf %33, %62 : vector<9x64xf32>
    %cst_19 = arith.constant dense<0.000000e+00> : vector<9xf32>
    %64 = vector.multi_reduction <add>, %63, %cst_19 [1] : vector<9x64xf32> to vector<9xf32>
    %65 = vector.shape_cast %64 : vector<9xf32> to vector<9x1xf32>
    %cst_20 = arith.constant 1.000000e+00 : f32
    %66 = vector.broadcast %cst_20 : f32 to vector<1x1xf32>
    %67 = arith.maximumf %57, %66 : vector<1x1xf32>
    %68 = tpu.reciprocal %67 {approx = true} : vector<1x1xf32> -> vector<1x1xf32>
    %69 = vector.broadcast %68 : vector<1x1xf32> to vector<9x1xf32>
    %70 = arith.mulf %61, %69 : vector<9x1xf32>
    %cst_21 = arith.constant 0.000000e+00 : f32
    %71 = vector.broadcast %cst_21 : f32 to vector<1x1xf32>
    %72 = arith.cmpf ogt, %57, %71 : vector<1x1xf32>
    %73 = vector.shape_cast %72 : vector<1x1xi1> to vector<1x1xi1>
    %74 = vector.broadcast %73 : vector<1x1xi1> to vector<9x1xi1>
    %75 = arith.select %74, %70, %65 : vector<9x1xi1>, vector<9x1xf32>
    %76 = arith.mulf %75, %75 : vector<9x1xf32>
    %77 = vector.extract_strided_slice %76 {offsets = [0, 0], sizes = [3, 1], strides = [1, 1]} : vector<9x1xf32> to vector<3x1xf32>
    %cst_22 = arith.constant dense<0.000000e+00> : vector<1xf32>
    %78 = vector.multi_reduction <add>, %77, %cst_22 [0] : vector<3x1xf32> to vector<1xf32>
    %79 = vector.shape_cast %78 : vector<1xf32> to vector<1x1xf32>
    %80 = math.sqrt %79 : vector<1x1xf32>
    %cst_23 = arith.constant 9.99999993E-9 : f32
    %81 = vector.broadcast %cst_23 : f32 to vector<1x1xf32>
    %82 = arith.addf %80, %81 : vector<1x1xf32>
    %83 = vector.extract_strided_slice %76 {offsets = [3, 0], sizes = [3, 1], strides = [1, 1]} : vector<9x1xf32> to vector<3x1xf32>
    %cst_24 = arith.constant dense<0.000000e+00> : vector<1xf32>
    %84 = vector.multi_reduction <add>, %83, %cst_24 [0] : vector<3x1xf32> to vector<1xf32>
    %85 = vector.shape_cast %84 : vector<1xf32> to vector<1x1xf32>
    %86 = math.sqrt %85 : vector<1x1xf32>
    %cst_25 = arith.constant 9.99999993E-9 : f32
    %87 = vector.broadcast %cst_25 : f32 to vector<1x1xf32>
    %88 = arith.addf %86, %87 : vector<1x1xf32>
    %89 = vector.extract_strided_slice %76 {offsets = [6, 0], sizes = [3, 1], strides = [1, 1]} : vector<9x1xf32> to vector<3x1xf32>
    %cst_26 = arith.constant dense<0.000000e+00> : vector<1xf32>
    %90 = vector.multi_reduction <add>, %89, %cst_26 [0] : vector<3x1xf32> to vector<1xf32>
    %91 = vector.shape_cast %90 : vector<1xf32> to vector<1x1xf32>
    %92 = math.sqrt %91 : vector<1x1xf32>
    %cst_27 = arith.constant 9.99999993E-9 : f32
    %93 = vector.broadcast %cst_27 : f32 to vector<1x1xf32>
    %94 = arith.addf %92, %93 : vector<1x1xf32>
    %95 = vector.extract_strided_slice %75 {offsets = [0, 0], sizes = [3, 1], strides = [1, 1]} : vector<9x1xf32> to vector<3x1xf32>
    %96 = tpu.reciprocal %82 {approx = true} : vector<1x1xf32> -> vector<1x1xf32>
    %97 = vector.broadcast %96 : vector<1x1xf32> to vector<3x1xf32>
    %98 = arith.mulf %95, %97 : vector<3x1xf32>
    %99 = vector.extract_strided_slice %75 {offsets = [3, 0], sizes = [3, 1], strides = [1, 1]} : vector<9x1xf32> to vector<3x1xf32>
    %100 = tpu.reciprocal %88 {approx = true} : vector<1x1xf32> -> vector<1x1xf32>
    %101 = vector.broadcast %100 : vector<1x1xf32> to vector<3x1xf32>
    %102 = arith.mulf %99, %101 : vector<3x1xf32>
    %103 = vector.extract_strided_slice %75 {offsets = [6, 0], sizes = [3, 1], strides = [1, 1]} : vector<9x1xf32> to vector<3x1xf32>
    %104 = tpu.reciprocal %94 {approx = true} : vector<1x1xf32> -> vector<1x1xf32>
    %105 = vector.broadcast %104 : vector<1x1xf32> to vector<3x1xf32>
    %106 = arith.mulf %103, %105 : vector<3x1xf32>
    %107 = tpu.concatenate %98, %102, %106 in 0 : vector<3x1xf32>, vector<3x1xf32>, vector<3x1xf32> -> vector<9x1xf32>
    %108 = tpu.concatenate %46, %107 in 0 : vector<3x1xf32>, vector<9x1xf32> -> vector<12x1xf32>
    %c1 = arith.constant 1 : index
    %c0_28 = arith.constant 0 : index
    %c0_29 = arith.constant 0 : index
    %109 = vector.load %arg0[%c1, %c0_28, %c0_29] : memref<2x3x64xf32, #tpu.memory_space<vmem>>, vector<1x3x64xf32>
    %110 = vector.shape_cast %109 : vector<1x3x64xf32> to vector<3x64xf32>
    %c1_30 = arith.constant 1 : index
    %c0_31 = arith.constant 0 : index
    %c0_32 = arith.constant 0 : index
    %111 = vector.load %arg1[%c1_30, %c0_31, %c0_32] : memref<2x3x64xf32, #tpu.memory_space<vmem>>, vector<1x3x64xf32>
    %112 = vector.shape_cast %111 : vector<1x3x64xf32> to vector<3x64xf32>
    %113 = vector.extract_strided_slice %0 {offsets = [0, 0], sizes = [64, 1], strides = [1, 1]} : vector<64x3xf32> to vector<64x1xf32>
    %114 = vector.extract_strided_slice %112 {offsets = [0, 0], sizes = [1, 64], strides = [1, 1]} : vector<3x64xf32> to vector<1x64xf32>
    %115 = vector.broadcast %113 : vector<64x1xf32> to vector<64x64xf32>
    %116 = vector.broadcast %114 : vector<1x64xf32> to vector<64x64xf32>
    %117 = arith.mulf %115, %116 : vector<64x64xf32>
    %118 = vector.extract_strided_slice %0 {offsets = [0, 1], sizes = [64, 1], strides = [1, 1]} : vector<64x3xf32> to vector<64x1xf32>
    %119 = vector.extract_strided_slice %112 {offsets = [1, 0], sizes = [1, 64], strides = [1, 1]} : vector<3x64xf32> to vector<1x64xf32>
    %120 = vector.broadcast %118 : vector<64x1xf32> to vector<64x64xf32>
    %121 = vector.broadcast %119 : vector<1x64xf32> to vector<64x64xf32>
    %122 = arith.mulf %120, %121 : vector<64x64xf32>
    %123 = arith.addf %117, %122 : vector<64x64xf32>
    %124 = vector.extract_strided_slice %0 {offsets = [0, 2], sizes = [64, 1], strides = [1, 1]} : vector<64x3xf32> to vector<64x1xf32>
    %125 = vector.extract_strided_slice %112 {offsets = [2, 0], sizes = [1, 64], strides = [1, 1]} : vector<3x64xf32> to vector<1x64xf32>
    %126 = vector.broadcast %124 : vector<64x1xf32> to vector<64x64xf32>
    %127 = vector.broadcast %125 : vector<1x64xf32> to vector<64x64xf32>
    %128 = arith.mulf %126, %127 : vector<64x64xf32>
    %129 = arith.addf %123, %128 : vector<64x64xf32>
    %130 = vector.broadcast %1 : vector<64x1xf32> to vector<64x64xf32>
    %131 = arith.addf %129, %130 : vector<64x64xf32>
    %cst_33 = arith.constant 0.000000e+00 : f32
    %132 = vector.broadcast %cst_33 : f32 to vector<64x64xf32>
    %133 = arith.maximumf %131, %132 : vector<64x64xf32>
    %cst_34 = arith.constant dense<0.000000e+00> : vector<10x64xf32>
    %134 = tpu.matmul %2, %133, %cst_34 {dimension_numbers = #tpu.dot_dimension_numbers<[1], [0], [0], [1], [0, 0, 1, 1], [], []>} : vector<10x64xf32>, vector<64x64xf32>, vector<10x64xf32> -> vector<10x64xf32>
    %135 = vector.broadcast %3 : vector<10x1xf32> to vector<10x64xf32>
    %136 = arith.addf %134, %135 : vector<10x64xf32>
    %137 = vector.extract_strided_slice %136 {offsets = [0, 0], sizes = [1, 64], strides = [1, 1]} : vector<10x64xf32> to vector<1x64xf32>
    %138 = vector.extract_strided_slice %136 {offsets = [1, 0], sizes = [9, 64], strides = [1, 1]} : vector<10x64xf32> to vector<9x64xf32>
    %cst_35 = arith.constant dense<0xFF800000> : vector<1xf32>
    %139 = vector.multi_reduction <maximumf>, %137, %cst_35 [1] : vector<1x64xf32> to vector<1xf32>
    %140 = vector.shape_cast %139 : vector<1xf32> to vector<1x1xf32>
    %141 = vector.broadcast %140 : vector<1x1xf32> to vector<1x64xf32>
    %142 = arith.subf %137, %141 : vector<1x64xf32>
    %143 = math.exp %142 : vector<1x64xf32>
    %cst_36 = arith.constant dense<0.000000e+00> : vector<1xf32>
    %144 = vector.multi_reduction <add>, %143, %cst_36 [1] : vector<1x64xf32> to vector<1xf32>
    %145 = vector.shape_cast %144 : vector<1xf32> to vector<1x1xf32>
    %146 = vector.broadcast %145 : vector<1x1xf32> to vector<1x64xf32>
    %147 = arith.divf %143, %146 : vector<1x64xf32>
    %148 = vector.broadcast %147 : vector<1x64xf32> to vector<3x64xf32>
    %149 = arith.mulf %110, %148 : vector<3x64xf32>
    %cst_37 = arith.constant dense<0.000000e+00> : vector<3xf32>
    %150 = vector.multi_reduction <add>, %149, %cst_37 [1] : vector<3x64xf32> to vector<3xf32>
    %151 = vector.shape_cast %150 : vector<3xf32> to vector<3x1xf32>
    %152 = vector.broadcast %151 : vector<3x1xf32> to vector<3x64xf32>
    %153 = arith.subf %110, %152 : vector<3x64xf32>
    %154 = arith.mulf %153, %153 : vector<3x64xf32>
    %cst_38 = arith.constant dense<0.000000e+00> : vector<64xf32>
    %155 = vector.multi_reduction <add>, %154, %cst_38 [0] : vector<3x64xf32> to vector<64xf32>
    %156 = vector.shape_cast %155 : vector<64xf32> to vector<1x64xf32>
    %cst_39 = arith.constant 4.000000e-04 : f32
    %157 = vector.broadcast %cst_39 : f32 to vector<1x64xf32>
    %158 = arith.cmpf olt, %156, %157 : vector<1x64xf32>
    %159 = arith.extui %158 : vector<1x64xi1> to vector<1x64xi32>
    %160 = arith.sitofp %159 : vector<1x64xi32> to vector<1x64xf32>
    %cst_40 = arith.constant dense<0.000000e+00> : vector<1xf32>
    %161 = vector.multi_reduction <add>, %160, %cst_40 [1] : vector<1x64xf32> to vector<1xf32>
    %162 = vector.shape_cast %161 : vector<1xf32> to vector<1x1xf32>
    %163 = vector.broadcast %160 : vector<1x64xf32> to vector<9x64xf32>
    %164 = arith.mulf %138, %163 : vector<9x64xf32>
    %cst_41 = arith.constant dense<0.000000e+00> : vector<9xf32>
    %165 = vector.multi_reduction <add>, %164, %cst_41 [1] : vector<9x64xf32> to vector<9xf32>
    %166 = vector.shape_cast %165 : vector<9xf32> to vector<9x1xf32>
    %167 = vector.broadcast %147 : vector<1x64xf32> to vector<9x64xf32>
    %168 = arith.mulf %138, %167 : vector<9x64xf32>
    %cst_42 = arith.constant dense<0.000000e+00> : vector<9xf32>
    %169 = vector.multi_reduction <add>, %168, %cst_42 [1] : vector<9x64xf32> to vector<9xf32>
    %170 = vector.shape_cast %169 : vector<9xf32> to vector<9x1xf32>
    %cst_43 = arith.constant 1.000000e+00 : f32
    %171 = vector.broadcast %cst_43 : f32 to vector<1x1xf32>
    %172 = arith.maximumf %162, %171 : vector<1x1xf32>
    %173 = tpu.reciprocal %172 {approx = true} : vector<1x1xf32> -> vector<1x1xf32>
    %174 = vector.broadcast %173 : vector<1x1xf32> to vector<9x1xf32>
    %175 = arith.mulf %166, %174 : vector<9x1xf32>
    %cst_44 = arith.constant 0.000000e+00 : f32
    %176 = vector.broadcast %cst_44 : f32 to vector<1x1xf32>
    %177 = arith.cmpf ogt, %162, %176 : vector<1x1xf32>
    %178 = vector.shape_cast %177 : vector<1x1xi1> to vector<1x1xi1>
    %179 = vector.broadcast %178 : vector<1x1xi1> to vector<9x1xi1>
    %180 = arith.select %179, %175, %170 : vector<9x1xi1>, vector<9x1xf32>
    %181 = arith.mulf %180, %180 : vector<9x1xf32>
    %182 = vector.extract_strided_slice %181 {offsets = [0, 0], sizes = [3, 1], strides = [1, 1]} : vector<9x1xf32> to vector<3x1xf32>
    %cst_45 = arith.constant dense<0.000000e+00> : vector<1xf32>
    %183 = vector.multi_reduction <add>, %182, %cst_45 [0] : vector<3x1xf32> to vector<1xf32>
    %184 = vector.shape_cast %183 : vector<1xf32> to vector<1x1xf32>
    %185 = math.sqrt %184 : vector<1x1xf32>
    %cst_46 = arith.constant 9.99999993E-9 : f32
    %186 = vector.broadcast %cst_46 : f32 to vector<1x1xf32>
    %187 = arith.addf %185, %186 : vector<1x1xf32>
    %188 = vector.extract_strided_slice %181 {offsets = [3, 0], sizes = [3, 1], strides = [1, 1]} : vector<9x1xf32> to vector<3x1xf32>
    %cst_47 = arith.constant dense<0.000000e+00> : vector<1xf32>
    %189 = vector.multi_reduction <add>, %188, %cst_47 [0] : vector<3x1xf32> to vector<1xf32>
    %190 = vector.shape_cast %189 : vector<1xf32> to vector<1x1xf32>
    %191 = math.sqrt %190 : vector<1x1xf32>
    %cst_48 = arith.constant 9.99999993E-9 : f32
    %192 = vector.broadcast %cst_48 : f32 to vector<1x1xf32>
    %193 = arith.addf %191, %192 : vector<1x1xf32>
    %194 = vector.extract_strided_slice %181 {offsets = [6, 0], sizes = [3, 1], strides = [1, 1]} : vector<9x1xf32> to vector<3x1xf32>
    %cst_49 = arith.constant dense<0.000000e+00> : vector<1xf32>
    %195 = vector.multi_reduction <add>, %194, %cst_49 [0] : vector<3x1xf32> to vector<1xf32>
    %196 = vector.shape_cast %195 : vector<1xf32> to vector<1x1xf32>
    %197 = math.sqrt %196 : vector<1x1xf32>
    %cst_50 = arith.constant 9.99999993E-9 : f32
    %198 = vector.broadcast %cst_50 : f32 to vector<1x1xf32>
    %199 = arith.addf %197, %198 : vector<1x1xf32>
    %200 = vector.extract_strided_slice %180 {offsets = [0, 0], sizes = [3, 1], strides = [1, 1]} : vector<9x1xf32> to vector<3x1xf32>
    %201 = tpu.reciprocal %187 {approx = true} : vector<1x1xf32> -> vector<1x1xf32>
    %202 = vector.broadcast %201 : vector<1x1xf32> to vector<3x1xf32>
    %203 = arith.mulf %200, %202 : vector<3x1xf32>
    %204 = vector.extract_strided_slice %180 {offsets = [3, 0], sizes = [3, 1], strides = [1, 1]} : vector<9x1xf32> to vector<3x1xf32>
    %205 = tpu.reciprocal %193 {approx = true} : vector<1x1xf32> -> vector<1x1xf32>
    %206 = vector.broadcast %205 : vector<1x1xf32> to vector<3x1xf32>
    %207 = arith.mulf %204, %206 : vector<3x1xf32>
    %208 = vector.extract_strided_slice %180 {offsets = [6, 0], sizes = [3, 1], strides = [1, 1]} : vector<9x1xf32> to vector<3x1xf32>
    %209 = tpu.reciprocal %199 {approx = true} : vector<1x1xf32> -> vector<1x1xf32>
    %210 = vector.broadcast %209 : vector<1x1xf32> to vector<3x1xf32>
    %211 = arith.mulf %208, %210 : vector<3x1xf32>
    %212 = tpu.concatenate %203, %207, %211 in 0 : vector<3x1xf32>, vector<3x1xf32>, vector<3x1xf32> -> vector<9x1xf32>
    %213 = tpu.concatenate %151, %212 in 0 : vector<3x1xf32>, vector<9x1xf32> -> vector<12x1xf32>
    %214 = tpu.concatenate %108, %213 in 1 : vector<12x1xf32>, vector<12x1xf32> -> vector<12x2xf32>
    %c0_51 = arith.constant 0 : index
    %c0_52 = arith.constant 0 : index
    %215 = vector.load %arg4[%c0_51, %c0_52] : memref<12x2xf32, #tpu.memory_space<vmem>>, vector<12x2xf32>
    tpu.vector_store %arg4[%c0_51, %c0_52], %214 {strides = array<i32>} : memref<12x2xf32, #tpu.memory_space<vmem>>, vector<12x2xf32>,
    return
  }
}

</mosaic_0001>

<llo_original>
// kernel: manip_forward.1
$region0: #{manip_forward.1}
  #allocation0 [shape = 'u32[]', space=smem, size = 0x4, offset = 0x4, fixed_abs, tag = 'smem constant byte address 0x4 - core index']
  #allocation1 [shape = 'u32[72,128]{1,0:T(1,128)}', space=vmem, size = 0x9000, scoped, tag = 'internal scratch']
  %s0 = inlined_call_operand.vmem [shape: f32[2,3,64], index: 0, kind: input, shape index: {}]
  %s1 = inlined_call_operand.vmem [shape: f32[2,3,64], index: 1, kind: input, shape index: {}]
  %s2 = inlined_call_operand.vmem [shape: f32[64,4], index: 2, kind: input, shape index: {}]
  %s3 = inlined_call_operand.vmem [shape: f32[10,65], index: 3, kind: input, shape index: {}]
  %s4 = inlined_call_operand.vmem [shape: f32[12,2], index: 4, kind: output, shape index: {}]
  %s5 = sld [smem:[#allocation0]]
  $region26: #{manip_forward.1} parent=0
    _
  %s7 = ssub.s32 1, %s5
  %s8 = scalar_select 0, %s7, %s5
  // Predicated region
  $region2: #{manip_forward.1} parent=0 // pred_check
    _
  $region3: #{manip_forward.1} parent=0 // pred_check_branch
    %10 = sbr.rel (0) target = $region5
  $region4: #{manip_forward.1} parent=0 // pred_region
    _
  $region5: #{manip_forward.1} parent=0 // pred_fallthru
    _
  // Predicated region
  $region6: #{manip_forward.1} parent=0 // pred_check
    _
  $region7: #{manip_forward.1} parent=0 // pred_check_branch
    %12 = sbr.rel (0) target = $region9
  $region8: #{manip_forward.1} parent=0 // pred_region
    _
  $region9: #{manip_forward.1} parent=0 // pred_fallthru
    _
  // Predicated region
  $region10: #{manip_forward.1} parent=0 // pred_check
    _
  $region11: #{manip_forward.1} parent=0 // pred_check_branch
    %14 = sbr.rel (0) target = $region13
  $region12: #{manip_forward.1} parent=0 // pred_region
    _
  $region13: #{manip_forward.1} parent=0 // pred_fallthru
    _
  // Predicated region
  $region14: #{manip_forward.1} parent=0 // pred_check
    _
  $region15: #{manip_forward.1} parent=0 // pred_check_branch
    %16 = sbr.rel (0) target = $region17
  $region16: #{manip_forward.1} parent=0 // pred_region
    _
  $region17: #{manip_forward.1} parent=0 // pred_fallthru
    _
  %v17 = vld [vmem:[%s2] sm:$0xff]
  %v18 = vld [vmem:[%s2 + $0x8] sm:$0xff]
  %v19 = vld [vmem:[%s2 + $0x10] sm:$0xff]
  %v20 = vld [vmem:[%s2 + $0x18] sm:$0xff]
  %v21 = vld [vmem:[%s2 + $0x20] sm:$0xff]
  %v22 = vld [vmem:[%s2 + $0x28] sm:$0xff]
  %v23 = vld [vmem:[%s2 + $0x30] sm:$0xff]
  %v24 = vld [vmem:[%s2 + $0x38] sm:$0xff]
  %v25 = vld [vmem:[%s3] sm:$0xff]
  %v26 = vld [vmem:[%s3 + $0x8] sm:$0x3]
  %v27 = vld [vmem:[%s0] sm:$0x7]
  %v28 = vld [vmem:[%s1] sm:$0x7]
  %30 = vset.pattern.permute.xlu0 0
  %31 = vperm.xlu0 %30, %v17
  %v32 = vpop.permute.xlu0 %31
  %35 = vset.pattern.permute.xlu0 0
  %36 = vperm.xlu0 %35, %v18
  %v37 = vpop.permute.xlu0 %36
  %40 = vset.pattern.permute.xlu0 0
  %41 = vperm.xlu0 %40, %v19
  %v42 = vpop.permute.xlu0 %41
  %45 = vset.pattern.permute.xlu0 0
  %46 = vperm.xlu0 %45, %v20
  %v47 = vpop.permute.xlu0 %46
  %50 = vset.pattern.permute.xlu0 0
  %51 = vperm.xlu0 %50, %v21
  %v52 = vpop.permute.xlu0 %51
  %55 = vset.pattern.permute.xlu0 0
  %56 = vperm.xlu0 %55, %v22
  %v57 = vpop.permute.xlu0 %56
  %60 = vset.pattern.permute.xlu0 0
  %61 = vperm.xlu0 %60, %v23
  %v62 = vpop.permute.xlu0 %61
  %65 = vset.pattern.permute.xlu0 0
  %66 = vperm.xlu0 %65, %v24
  %v67 = vpop.permute.xlu0 %66
  %v69 = vperm.slane %v28, 0
  %v70 = vmul.f32 %v32, %v69
  %v71 = vmul.f32 %v37, %v69
  %v72 = vmul.f32 %v42, %v69
  %v73 = vmul.f32 %v47, %v69
  %v74 = vmul.f32 %v52, %v69
  %v75 = vmul.f32 %v57, %v69
  %v76 = vmul.f32 %v62, %v69
  %v77 = vmul.f32 %v67, %v69
  %78 = vset.pattern.permute.xlu0 1
  %79 = vperm.xlu0 %78, %v17
  %v80 = vpop.permute.xlu0 %79
  %82 = vset.pattern.permute.xlu0 1
  %83 = vperm.xlu0 %82, %v18
  %v84 = vpop.permute.xlu0 %83
  %86 = vset.pattern.permute.xlu0 1
  %87 = vperm.xlu0 %86, %v19
  %v88 = vpop.permute.xlu0 %87
  %90 = vset.pattern.permute.xlu0 1
  %91 = vperm.xlu0 %90, %v20
  %v92 = vpop.permute.xlu0 %91
  %94 = vset.pattern.permute.xlu0 1
  %95 = vperm.xlu0 %94, %v21
  %v96 = vpop.permute.xlu0 %95
  %98 = vset.pattern.permute.xlu0 1
  %99 = vperm.xlu0 %98, %v22
  %v100 = vpop.permute.xlu0 %99
  %102 = vset.pattern.permute.xlu0 1
  %103 = vperm.xlu0 %102, %v23
  %v104 = vpop.permute.xlu0 %103
  %106 = vset.pattern.permute.xlu0 1
  %107 = vperm.xlu0 %106, %v24
  %v108 = vpop.permute.xlu0 %107
  %v110 = vperm.slane %v28, 1
  %v111 = vmul.f32 %v80, %v110
  %v112 = vmul.f32 %v84, %v110
  %v113 = vmul.f32 %v88, %v110
  %v114 = vmul.f32 %v92, %v110
  %v115 = vmul.f32 %v96, %v110
  %v116 = vmul.f32 %v100, %v110
  %v117 = vmul.f32 %v104, %v110
  %v118 = vmul.f32 %v108, %v110
  %v119 = vadd.f32 %v70, %v111
  %v120 = vadd.f32 %v71, %v112
  %v121 = vadd.f32 %v72, %v113
  %v122 = vadd.f32 %v73, %v114
  %v123 = vadd.f32 %v74, %v115
  %v124 = vadd.f32 %v75, %v116
  %v125 = vadd.f32 %v76, %v117
  %v126 = vadd.f32 %v77, %v118
  %127 = vset.pattern.permute.xlu0 2
  %128 = vperm.xlu0 %127, %v17
  %v129 = vpop.permute.xlu0 %128
  %131 = vset.pattern.permute.xlu0 2
  %132 = vperm.xlu0 %131, %v18
  %v133 = vpop.permute.xlu0 %132
  %135 = vset.pattern.permute.xlu0 2
  %136 = vperm.xlu0 %135, %v19
  %v137 = vpop.permute.xlu0 %136
  %139 = vset.pattern.permute.xlu0 2
  %140 = vperm.xlu0 %139, %v20
  %v141 = vpop.permute.xlu0 %140
  %143 = vset.pattern.permute.xlu0 2
  %144 = vperm.xlu0 %143, %v21
  %v145 = vpop.permute.xlu0 %144
  %147 = vset.pattern.permute.xlu0 2
  %148 = vperm.xlu0 %147, %v22
  %v149 = vpop.permute.xlu0 %148
  %151 = vset.pattern.permute.xlu0 2
  %152 = vperm.xlu0 %151, %v23
  %v153 = vpop.permute.xlu0 %152
  %155 = vset.pattern.permute.xlu0 2
  %156 = vperm.xlu0 %155, %v24
  %v157 = vpop.permute.xlu0 %156
  %v159 = vperm.slane %v28, 2
  %v160 = vmul.f32 %v129, %v159
  %v161 = vmul.f32 %v133, %v159
  %v162 = vmul.f32 %v137, %v159
  %v163 = vmul.f32 %v141, %v159
  %v164 = vmul.f32 %v145, %v159
  %v165 = vmul.f32 %v149, %v159
  %v166 = vmul.f32 %v153, %v159
  %v167 = vmul.f32 %v157, %v159
  %v168 = vadd.f32 %v119, %v160
  %v169 = vadd.f32 %v120, %v161
  %v170 = vadd.f32 %v121, %v162
  %v171 = vadd.f32 %v122, %v163
  %v172 = vadd.f32 %v123, %v164
  %v173 = vadd.f32 %v124, %v165
  %v174 = vadd.f32 %v125, %v166
  %v175 = vadd.f32 %v126, %v167
  %176 = vset.pattern.permute.xlu0 3
  %177 = vperm.xlu0 %176, %v17
  %v178 = vpop.permute.xlu0 %177
  %180 = vset.pattern.permute.xlu0 3
  %181 = vperm.xlu0 %180, %v18
  %v182 = vpop.permute.xlu0 %181
  %184 = vset.pattern.permute.xlu0 3
  %185 = vperm.xlu0 %184, %v19
  %v186 = vpop.permute.xlu0 %185
  %188 = vset.pattern.permute.xlu0 3
  %189 = vperm.xlu0 %188, %v20
  %v190 = vpop.permute.xlu0 %189
  %192 = vset.pattern.permute.xlu0 3
  %193 = vperm.xlu0 %192, %v21
  %v194 = vpop.permute.xlu0 %193
  %196 = vset.pattern.permute.xlu0 3
  %197 = vperm.xlu0 %196, %v22
  %v198 = vpop.permute.xlu0 %197
  %200 = vset.pattern.permute.xlu0 3
  %201 = vperm.xlu0 %200, %v23
  %v202 = vpop.permute.xlu0 %201
  %204 = vset.pattern.permute.xlu0 3
  %205 = vperm.xlu0 %204, %v24
  %v206 = vpop.permute.xlu0 %205
  %v208 = vadd.f32 %v168, %v178
  %v209 = vadd.f32 %v169, %v182
  %v210 = vadd.f32 %v170, %v186
  %v211 = vadd.f32 %v171, %v190
  %v212 = vadd.f32 %v172, %v194
  %v213 = vadd.f32 %v173, %v198
  %v214 = vadd.f32 %v174, %v202
  %v215 = vadd.f32 %v175, %v206
  %v216 = vmax.f32 %v208, 0.0
  %v217 = vmax.f32 %v209, 0.0
  %v218 = vmax.f32 %v210, 0.0
  %v219 = vmax.f32 %v211, 0.0
  %v220 = vmax.f32 %v212, 0.0
  %v221 = vmax.f32 %v213, 0.0
  %v222 = vmax.f32 %v214, 0.0
  %v223 = vmax.f32 %v215, 0.0
  %225 = vset.pattern.permute.xlu0 64
  %226 = vperm.xlu0 %225, %v25
  %v227 = vpop.permute.xlu0 %226
  %230 = vset.pattern.permute.xlu0 64
  %231 = vperm.xlu0 %230, %v26
  %v232 = vpop.permute.xlu0 %231
  %vm234 = vcmask 523264
  %v235 = vsel %vm234, %v25, 0
  %v237 = vsel %vm234, %v26, 0
  %239 = vmatpush.msra.mxu0 0.0
  %240 = vmatpush.msra.mxu0 0.0
  %241 = vmatpush.msra.mxu0 0.0
  %242 = vmatpush.msra.mxu0 0.0
  %243 = vmatpush.msra.mxu0 0.0
  %244 = vmatpush.msra.mxu0 0.0
  %245 = vmatpush.msra.mxu0 0.0
  %246 = vmatpush.msra.mxu0 0.0
  %247 = vmatpush.msra.mxu0 %v223
  %248 = vmatpush.msra.mxu0 %v222
  %249 = vmatpush.msra.mxu0 %v221
  %250 = vmatpush.msra.mxu0 %v220
  %251 = vmatpush.msra.mxu0 %v219
  %252 = vmatpush.msra.mxu0 %v218
  %253 = vmatpush.msra.mxu0 %v217
  %254 = vmatpush.msra.mxu0 %v216
  %255 = vmatmul.f32.gmra.mxu0 %v235
  %v256 = vpop.f32.mrf.mxu0
  %v257 = vadd.f32 %v227, %v256
  %258 = vmatmul.f32.gmra.mxu0 %v237
  %v259 = vpop.f32.mrf.mxu0
  %v260 = vadd.f32 %v232, %v259
  %261 = vdwg.mxu0
  %vm262 = vcmask 516096
  %v263 = vsel %vm262, %v257, -inf
  %264 = vmax.xlane.f32.xlu0 %v263
  %v265 = vpop.xlane.xlu0 %264
  %v266 = vsub.f32 %v257, %v265
  %v267 = vmul.f32 %v266, 1.442695
  %v268 = vpow.pop %v267
  %v269 = vsel %vm262, %v268, 0.0
  %270 = vadd.xlane.f32.xlu0 %v269
  %v271 = vpop.xlane.xlu0 %270
  %v272 = vrcp.pop %v271
  %v273 = vmul.f32 %v271, %v272
  %v274 = vsub.f32 1.0, %v273
  %v275 = vmul.f32 %v272, %v274
  %v276 = vadd.f32 %v272, %v275
  %vm277 = vweird.f32 %v271
  %vm278 = vweird.f32 %v272
  %vm279 = vmor %vm277, %vm278
  %v280 = vsel %vm279, %v272, %v276
  %v281 = vand.u32 2147483647, %v271
  %vm282 = vcmp.eq.f32.partialorder %v281, 8.507059e+37
  %v283 = vand.u32 %v271, 2147483648
  %v284 = vor.u32 1.1754944e-38, %v283
  %v285 = vsel %vm282, %v284, %v280
  %v286 = vmul.f32 %v268, %v285
  %v287 = vperm.slane %v286, 0
  %v288 = vmul.f32 %v27, %v287
  %vm289 = vcmask 518144
  %v290 = vsel %vm289, %v288, 0.0
  %291 = vadd.xlane.f32.xlu0 %v290
  %v292 = vpop.xlane.xlu0 %291
  %v293 = vsub.f32 %v27, %v292
  %v294 = vmul.f32 %v293, %v293
  %v295 = vsel %vm289, %v294, 0.0
  %v296 = vrot.slane %v295, 4
  %v297 = vadd.f32 %v295, %v296
  %v298 = vrot.slane %v297, 2
  %v299 = vadd.f32 %v297, %v298
  %v300 = vrot.slane %v299, 1
  %v301 = vadd.f32 %v299, %v300
  %vm302 = vcmp.lt.f32.partialorder %v301, 0.0004
  %v303 = vsel %vm302, 1, 0
  %v304 = vcvt.s32.f32 %v303
  %v305 = vsel %vm234, %v304, 0.0
  %306 = vadd.xlane.f32.xlu0 %v305
  %v307 = vpop.xlane.xlu0 %306
  %v308 = vmul.f32 %v257, %v304
  %v309 = vmul.f32 %v260, %v304
  %vm310 = vcmask 523265
  %v311 = vsel %vm310, %v308, 0.0
  %312 = vadd.xlane.f32.xlu0 %v311
  %v313 = vpop.xlane.xlu0 %312
  %vm314 = vcmask 517120
  %v315 = vsel %vm314, %v309, 0.0
  %316 = vadd.xlane.f32.xlu0 %v315
  %v317 = vpop.xlane.xlu0 %316
  %v318 = vmul.f32 %v257, %v287
  %v319 = vmul.f32 %v260, %v287
  %v320 = vsel %vm310, %v318, 0.0
  %321 = vadd.xlane.f32.xlu0 %v320
  %v322 = vpop.xlane.xlu0 %321
  %v323 = vsel %vm314, %v319, 0.0
  %324 = vadd.xlane.f32.xlu0 %v323
  %v325 = vpop.xlane.xlu0 %324
  %v326 = vmax.f32 %v307, 1.0
  %v327 = vrcp.pop %v326
  %v328 = vmul.f32 %v313, %v327
  %v329 = vmul.f32 %v317, %v327
  %vm330 = vcmp.gt.f32.partialorder %v307, 0.0
  %v331 = vsel %vm330, 1, 0
  %vm332 = vcmp.eq.s32.totalorder %v331, 1
  %v333 = vsel %vm332, %v328, %v322
  %v334 = vsel %vm332, %v329, %v325
  %v335 = vmul.f32 %v333, %v333
  %v336 = vmul.f32 %v334, %v334
  %v338 = vrot.slane %v335, 1
  %vm340 = vcmask 1042432
  %v341 = vsel %vm340, %v338, 0.0
  %v342 = vrot.slane %v341, 4
  %v343 = vadd.f32 %v341, %v342
  %v344 = vrot.slane %v343, 2
  %v345 = vadd.f32 %v343, %v344
  %v346 = vrot.slane %v345, 1
  %v347 = vadd.f32 %v345, %v346
  %v348 = vrsqrt.pop %v347
  %v349 = vmul.f32 %v348, %v347
  %v350 = vmul.f32 %v349, %v348
  %v351 = vmul.f32 0.5, %v350
  %v352 = vsub.f32 1.5, %v351
  %v353 = vmul.f32 %v348, %v352
  %v354 = vmul.f32 %v347, %v353
  %vm355 = vcmp.eq.f32.partialorder %v347, inf
  %v356 = vsel %vm355, %v347, %v354
  %vm357 = vcmp.eq.f32.partialorder %v347, 0.0
  %v358 = vand.u32 %v347, 2147483648
  %v359 = vsel %vm357, %v358, %v356
  %v360 = vadd.f32 %v359, 1e-08
  %v361 = vrot.slane %v335, 4
  %v363 = vsel %vm340, %v361, 0.0
  %v364 = vrot.slane %v363, 4
  %v365 = vadd.f32 %v363, %v364
  %v366 = vrot.slane %v365, 2
  %v367 = vadd.f32 %v365, %v366
  %v368 = vrot.slane %v367, 1
  %v369 = vadd.f32 %v367, %v368
  %v370 = vrsqrt.pop %v369
  %v371 = vmul.f32 %v370, %v369
  %v372 = vmul.f32 %v371, %v370
  %v373 = vmul.f32 0.5, %v372
  %v374 = vsub.f32 1.5, %v373
  %v375 = vmul.f32 %v370, %v374
  %v376 = vmul.f32 %v369, %v375
  %vm377 = vcmp.eq.f32.partialorder %v369, inf
  %v378 = vsel %vm377, %v369, %v376
  %vm379 = vcmp.eq.f32.partialorder %v369, 0.0
  %v380 = vand.u32 %v369, 2147483648
  %v381 = vsel %vm379, %v380, %v378
  %v382 = vadd.f32 %v381, 1e-08
  %vm384 = vcmask 1040384
  %v385 = vrot.slane %v335, 7
  %v386 = vrot.slane %v336, 7
  %v387 = vsel %vm384, %v385, %v386
  %v389 = vsel %vm340, %v387, 0.0
  %v390 = vrot.slane %v389, 4
  %v391 = vadd.f32 %v389, %v390
  %v392 = vrot.slane %v391, 2
  %v393 = vadd.f32 %v391, %v392
  %v394 = vrot.slane %v393, 1
  %v395 = vadd.f32 %v393, %v394
  %v396 = vrsqrt.pop %v395
  %v397 = vmul.f32 %v396, %v395
  %v398 = vmul.f32 %v397, %v396
  %v399 = vmul.f32 0.5, %v398
  %v400 = vsub.f32 1.5, %v399
  %v401 = vmul.f32 %v396, %v400
  %v402 = vmul.f32 %v395, %v401
  %vm403 = vcmp.eq.f32.partialorder %v395, inf
  %v404 = vsel %vm403, %v395, %v402
  %vm405 = vcmp.eq.f32.partialorder %v395, 0.0
  %v406 = vand.u32 %v395, 2147483648
  %v407 = vsel %vm405, %v406, %v404
  %v408 = vadd.f32 %v407, 1e-08
  %v409 = vrcp.pop %v360
  %v410 = vmul.f32 %v333, %v409
  %v411 = vrcp.pop %v382
  %v412 = vmul.f32 %v333, %v411
  %v413 = vrcp.pop %v408
  %v414 = vmul.f32 %v333, %v413
  %v415 = vmul.f32 %v334, %v413
  %v417 = vrot.slane %v410, 1
  %v420 = vrot.slane %v412, 1
  %vm424 = vcmask 1046528
  %v425 = vrot.slane %v414, 1
  %v426 = vrot.slane %v415, 1
  %v427 = vsel %vm424, %v425, %v426
  %v429 = vsel %vm340, %v417, %v420
  %vm430 = vcmask 1045504
  %v431 = vsel %vm430, %v429, %v427
  %v433 = vrot.slane %v431, 5
  %v434 = vrot.slane %v426, 5
  %v435 = vsel %vm340, %v433, %v434
  %v438 = vsel %vm340, %v292, %v433
  %s439 = scalar_lea.vmem %s0, 4
  %v440 = vld [vmem:[%s439] sm:$0x7]
  %s441 = scalar_lea.vmem %s1, 4
  %v442 = vld [vmem:[%s441] sm:$0x7]
  %v443 = vperm.slane %v442, 0
  %v444 = vmul.f32 %v32, %v443
  %v445 = vmul.f32 %v37, %v443
  %v446 = vmul.f32 %v42, %v443
  %v447 = vmul.f32 %v47, %v443
  %v448 = vmul.f32 %v52, %v443
  %v449 = vmul.f32 %v57, %v443
  %v450 = vmul.f32 %v62, %v443
  %v451 = vmul.f32 %v67, %v443
  %v452 = vperm.slane %v442, 1
  %v453 = vmul.f32 %v80, %v452
  %v454 = vmul.f32 %v84, %v452
  %v455 = vmul.f32 %v88, %v452
  %v456 = vmul.f32 %v92, %v452
  %v457 = vmul.f32 %v96, %v452
  %v458 = vmul.f32 %v100, %v452
  %v459 = vmul.f32 %v104, %v452
  %v460 = vmul.f32 %v108, %v452
  %v461 = vadd.f32 %v444, %v453
  %v462 = vadd.f32 %v445, %v454
  %v463 = vadd.f32 %v446, %v455
  %v464 = vadd.f32 %v447, %v456
  %v465 = vadd.f32 %v448, %v457
  %v466 = vadd.f32 %v449, %v458
  %v467 = vadd.f32 %v450, %v459
  %v468 = vadd.f32 %v451, %v460
  %v469 = vperm.slane %v442, 2
  %v470 = vmul.f32 %v129, %v469
  %v471 = vmul.f32 %v133, %v469
  %v472 = vmul.f32 %v137, %v469
  %v473 = vmul.f32 %v141, %v469
  %v474 = vmul.f32 %v145, %v469
  %v475 = vmul.f32 %v149, %v469
  %v476 = vmul.f32 %v153, %v469
  %v477 = vmul.f32 %v157, %v469
  %v478 = vadd.f32 %v461, %v470
  %v479 = vadd.f32 %v462, %v471
  %v480 = vadd.f32 %v463, %v472
  %v481 = vadd.f32 %v464, %v473
  %v482 = vadd.f32 %v465, %v474
  %v483 = vadd.f32 %v466, %v475
  %v484 = vadd.f32 %v467, %v476
  %v485 = vadd.f32 %v468, %v477
  %v486 = vadd.f32 %v478, %v178
  %v487 = vadd.f32 %v479, %v182
  %v488 = vadd.f32 %v480, %v186
  %v489 = vadd.f32 %v481, %v190
  %v490 = vadd.f32 %v482, %v194
  %v491 = vadd.f32 %v483, %v198
  %v492 = vadd.f32 %v484, %v202
  %v493 = vadd.f32 %v485, %v206
  %v494 = vmax.f32 %v486, 0.0
  %v495 = vmax.f32 %v487, 0.0
  %v496 = vmax.f32 %v488, 0.0
  %v497 = vmax.f32 %v489, 0.0
  %v498 = vmax.f32 %v490, 0.0
  %v499 = vmax.f32 %v491, 0.0
  %v500 = vmax.f32 %v492, 0.0
  %v501 = vmax.f32 %v493, 0.0
  %502 = vmatpush.msra.mxu0 0.0
  %503 = vmatpush.msra.mxu0 0.0
  %504 = vmatpush.msra.mxu0 0.0
  %505 = vmatpush.msra.mxu0 0.0
  %506 = vmatpush.msra.mxu0 0.0
  %507 = vmatpush.msra.mxu0 0.0
  %508 = vmatpush.msra.mxu0 0.0
  %509 = vmatpush.msra.mxu0 0.0
  %510 = vmatpush.msra.mxu0 %v501
  %511 = vmatpush.msra.mxu0 %v500
  %512 = vmatpush.msra.mxu0 %v499
  %513 = vmatpush.msra.mxu0 %v498
  %514 = vmatpush.msra.mxu0 %v497
  %515 = vmatpush.msra.mxu0 %v496
  %516 = vmatpush.msra.mxu0 %v495
  %517 = vmatpush.msra.mxu0 %v494
  %518 = vmatmul.f32.gmra.mxu0 %v235
  %v519 = vpop.f32.mrf.mxu0
  %v520 = vadd.f32 %v227, %v519
  %521 = vmatmul.f32.gmra.mxu0 %v237
  %v522 = vpop.f32.mrf.mxu0
  %v523 = vadd.f32 %v232, %v522
  %524 = vdwg.mxu0
  %v525 = vsel %vm262, %v520, -inf
  %526 = vmax.xlane.f32.xlu0 %v525
  %v527 = vpop.xlane.xlu0 %526
  %v528 = vsub.f32 %v520, %v527
  %v529 = vmul.f32 %v528, 1.442695
  %v530 = vpow.pop %v529
  %v531 = vsel %vm262, %v530, 0.0
  %532 = vadd.xlane.f32.xlu0 %v531
  %v533 = vpop.xlane.xlu0 %532
  %v534 = vrcp.pop %v533
  %v535 = vmul.f32 %v533, %v534
  %v536 = vsub.f32 1.0, %v535
  %v537 = vmul.f32 %v534, %v536
  %v538 = vadd.f32 %v534, %v537
  %vm539 = vweird.f32 %v533
  %vm540 = vweird.f32 %v534
  %vm541 = vmor %vm539, %vm540
  %v542 = vsel %vm541, %v534, %v538
  %v543 = vand.u32 2147483647, %v533
  %vm544 = vcmp.eq.f32.partialorder %v543, 8.507059e+37
  %v545 = vand.u32 %v533, 2147483648
  %v546 = vor.u32 1.1754944e-38, %v545
  %v547 = vsel %vm544, %v546, %v542
  %v548 = vmul.f32 %v530, %v547
  %v549 = vperm.slane %v548, 0
  %v550 = vmul.f32 %v440, %v549
  %v551 = vsel %vm289, %v550, 0.0
  %552 = vadd.xlane.f32.xlu0 %v551
  %v553 = vpop.xlane.xlu0 %552
  %v554 = vsub.f32 %v440, %v553
  %v555 = vmul.f32 %v554, %v554
  %v556 = vsel %vm289, %v555, 0.0
  %v557 = vrot.slane %v556, 4
  %v558 = vadd.f32 %v556, %v557
  %v559 = vrot.slane %v558, 2
  %v560 = vadd.f32 %v558, %v559
  %v561 = vrot.slane %v560, 1
  %v562 = vadd.f32 %v560, %v561
  %vm563 = vcmp.lt.f32.partialorder %v562, 0.0004
  %v564 = vsel %vm563, 1, 0
  %v565 = vcvt.s32.f32 %v564
  %v566 = vsel %vm234, %v565, 0.0
  %567 = vadd.xlane.f32.xlu0 %v566
  %v568 = vpop.xlane.xlu0 %567
  %v569 = vmul.f32 %v520, %v565
  %v570 = vmul.f32 %v523, %v565
  %v571 = vsel %vm310, %v569, 0.0
  %572 = vadd.xlane.f32.xlu0 %v571
  %v573 = vpop.xlane.xlu0 %572
  %v574 = vsel %vm314, %v570, 0.0
  %575 = vadd.xlane.f32.xlu0 %v574
  %v576 = vpop.xlane.xlu0 %575
  %v577 = vmul.f32 %v520, %v549
  %v578 = vmul.f32 %v523, %v549
  %v579 = vsel %vm310, %v577, 0.0
  %580 = vadd.xlane.f32.xlu0 %v579
  %v581 = vpop.xlane.xlu0 %580
  %v582 = vsel %vm314, %v578, 0.0
  %583 = vadd.xlane.f32.xlu0 %v582
  %v584 = vpop.xlane.xlu0 %583
  %v585 = vmax.f32 %v568, 1.0
  %v586 = vrcp.pop %v585
  %v587 = vmul.f32 %v573, %v586
  %v588 = vmul.f32 %v576, %v586
  %vm589 = vcmp.gt.f32.partialorder %v568, 0.0
  %v590 = vsel %vm589, 1, 0
  %vm591 = vcmp.eq.s32.totalorder %v590, 1
  %v592 = vsel %vm591, %v587, %v581
  %v593 = vsel %vm591, %v588, %v584
  %v594 = vmul.f32 %v592, %v592
  %v595 = vmul.f32 %v593, %v593
  %v597 = vrot.slane %v594, 1
  %v599 = vsel %vm340, %v597, 0.0
  %v600 = vrot.slane %v599, 4
  %v601 = vadd.f32 %v599, %v600
  %v602 = vrot.slane %v601, 2
  %v603 = vadd.f32 %v601, %v602
  %v604 = vrot.slane %v603, 1
  %v605 = vadd.f32 %v603, %v604
  %v606 = vrsqrt.pop %v605
  %v607 = vmul.f32 %v606, %v605
  %v608 = vmul.f32 %v607, %v606
  %v609 = vmul.f32 0.5, %v608
  %v610 = vsub.f32 1.5, %v609
  %v611 = vmul.f32 %v606, %v610
  %v612 = vmul.f32 %v605, %v611
  %vm613 = vcmp.eq.f32.partialorder %v605, inf
  %v614 = vsel %vm613, %v605, %v612
  %vm615 = vcmp.eq.f32.partialorder %v605, 0.0
  %v616 = vand.u32 %v605, 2147483648
  %v617 = vsel %vm615, %v616, %v614
  %v618 = vadd.f32 %v617, 1e-08
  %v619 = vrot.slane %v594, 4
  %v621 = vsel %vm340, %v619, 0.0
  %v622 = vrot.slane %v621, 4
  %v623 = vadd.f32 %v621, %v622
  %v624 = vrot.slane %v623, 2
  %v625 = vadd.f32 %v623, %v624
  %v626 = vrot.slane %v625, 1
  %v627 = vadd.f32 %v625, %v626
  %v628 = vrsqrt.pop %v627
  %v629 = vmul.f32 %v628, %v627
  %v630 = vmul.f32 %v629, %v628
  %v631 = vmul.f32 0.5, %v630
  %v632 = vsub.f32 1.5, %v631
  %v633 = vmul.f32 %v628, %v632
  %v634 = vmul.f32 %v627, %v633
  %vm635 = vcmp.eq.f32.partialorder %v627, inf
  %v636 = vsel %vm635, %v627, %v634
  %vm637 = vcmp.eq.f32.partialorder %v627, 0.0
  %v638 = vand.u32 %v627, 2147483648
  %v639 = vsel %vm637, %v638, %v636
  %v640 = vadd.f32 %v639, 1e-08
  %v642 = vrot.slane %v594, 7
  %v643 = vrot.slane %v595, 7
  %v644 = vsel %vm384, %v642, %v643
  %v646 = vsel %vm340, %v644, 0.0
  %v647 = vrot.slane %v646, 4
  %v648 = vadd.f32 %v646, %v647
  %v649 = vrot.slane %v648, 2
  %v650 = vadd.f32 %v648, %v649
  %v651 = vrot.slane %v650, 1
  %v652 = vadd.f32 %v650, %v651
  %v653 = vrsqrt.pop %v652
  %v654 = vmul.f32 %v653, %v652
  %v655 = vmul.f32 %v654, %v653
  %v656 = vmul.f32 0.5, %v655
  %v657 = vsub.f32 1.5, %v656
  %v658 = vmul.f32 %v653, %v657
  %v659 = vmul.f32 %v652, %v658
  %vm660 = vcmp.eq.f32.partialorder %v652, inf
  %v661 = vsel %vm660, %v652, %v659
  %vm662 = vcmp.eq.f32.partialorder %v652, 0.0
  %v663 = vand.u32 %v652, 2147483648
  %v664 = vsel %vm662, %v663, %v661
  %v665 = vadd.f32 %v664, 1e-08
  %v666 = vrcp.pop %v618
  %v667 = vmul.f32 %v592, %v666
  %v668 = vrcp.pop %v640
  %v669 = vmul.f32 %v592, %v668
  %v670 = vrcp.pop %v665
  %v671 = vmul.f32 %v592, %v670
  %v672 = vmul.f32 %v593, %v670
  %v674 = vrot.slane %v667, 1
  %v677 = vrot.slane %v669, 1
  %v681 = vrot.slane %v671, 1
  %v682 = vrot.slane %v672, 1
  %v683 = vsel %vm424, %v681, %v682
  %v685 = vsel %vm340, %v674, %v677
  %v686 = vsel %vm430, %v685, %v683
  %v688 = vrot.slane %v686, 5
  %v689 = vrot.slane %v682, 5
  %v690 = vsel %vm340, %v688, %v689
  %v692 = vsel %vm340, %v553, %v688
  %694 = vrot.lane.b32.xlu0 %v692, 1
  %v695 = vpop.permute.xlu0 %694
  %696 = vrot.lane.b32.xlu0 %v690, 1
  %v697 = vpop.permute.xlu0 %696
  %vm700 = vcmask 7168
  %v701 = vsel %vm700, %v438, %v695
  %v702 = vsel %vm700, %v435, %v697
  %vm703 = vcmask 15360
  %704 = vst.msk [vmem:[%s4] sm:$0xff] %vm703, %v701
  %vm705 = vcmask 11264
  %706 = vst.msk [vmem:[%s4 + $0x8] sm:$0xf] %vm705, %v702
  // Predicated region
  $region18: #{manip_forward.1} parent=0 // pred_check
    _
  $region19: #{manip_forward.1} parent=0 // pred_check_branch
    %708 = sbr.rel (0) target = $region21
  $region20: #{manip_forward.1} parent=0 // pred_region
    _
  $region21: #{manip_forward.1} parent=0 // pred_fallthru
    _
  // Predicated region
  $region22: #{manip_forward.1} parent=0 // pred_check
    _
  $region23: #{manip_forward.1} parent=0 // pred_check_branch
    %710 = sbr.rel (0) target = $region25
  $region24: #{manip_forward.1} parent=0 // pred_region
    _
  $region25: #{manip_forward.1} parent=0 // pred_fallthru
    _

</llo_original>
